<compile_context>
chip_gen: v7x
topology: tpu7x:2x2x1
jax: 0.10.0
libtpu: 0.0.40
codegen_flags: <defaults>
</compile_context>

<pallas_src>
import functools

import jax
import jax.numpy as jnp
from jax.experimental import pallas as pl
from jax.experimental.pallas import tpu as pltpu

BN_EPS = 1e-5
LANE = 128
TM_MAX = 1024  # max batch-tile rows (working set stays far under VMEM limits)


def _round_up(v, m):
    return ((v + m - 1) // m) * m


def _mlp_kernel(x_ref, w_ref, b_ref, o_ref, *, d, out_dim):
    x = x_ref[...]                                               # [TM, d], d <= 128

    # layer 1: Linear + ReLU  (contract only over the d real input lanes)
    w1 = w_ref[0][:d, :]                                         # [d, 128]
    h = jnp.dot(x, w1, preferred_element_type=jnp.float32) + b_ref[0:1, :]
    h = jnp.maximum(h, 0.0)

    # layer 2: Linear + (dropout=id) + tanh   (BN2 folded into layer 3)
    h = jnp.tanh(jnp.dot(h, w_ref[1], preferred_element_type=jnp.float32) + b_ref[1:2, :])

    # layer 3: Linear(BN2-folded) + (dropout=id) + tanh   (BN3 folded into layer 4)
    h = jnp.tanh(jnp.dot(h, w_ref[2], preferred_element_type=jnp.float32) + b_ref[2:3, :])

    # layer 4: Linear(BN3-folded) + Sigmoid; only the real out_dim lanes stored.
    z = jnp.dot(h, w_ref[3], preferred_element_type=jnp.float32) + b_ref[3:4, :]
    o_ref[...] = jax.nn.sigmoid(z[:, :out_dim])


def _pad2(a, rows, cols):
    return jnp.pad(a, ((0, rows - a.shape[0]), (0, cols - a.shape[1])))


def fold_and_pack_params(p, eps=BN_EPS):
    """Host-side weight prep: fold BatchNorms into the next Linear, pad to
    128x128 tiles, and pack into a single weight stack + bias stack."""
    # BN2 folded into linear3 (applied to linear3's *input* rows).
    scale2 = p["g2"] * jax.lax.rsqrt(p["v2"] + eps)          # [1, h2]
    shift2 = p["be2"] - p["m2"] * scale2
    w3f = scale2.T * p["w3"]                                 # [h2, h3]
    b3f = p["b3"] + shift2 @ p["w3"]                         # [1, h3]

    # BN3 folded into linear4.
    scale3 = p["g3"] * jax.lax.rsqrt(p["v3"] + eps)          # [1, h3]
    shift3 = p["be3"] - p["m3"] * scale3
    w4f = scale3.T * p["w4"]                                 # [h3, out]
    b4f = p["b4"] + shift3 @ p["w4"]                         # [1, out]

    ws = [p["w1"], p["w2"], w3f, w4f]
    bs = [p["b1"], p["b2"], b3f, b4f]
    for w in ws:
        assert w.shape[0] <= LANE and w.shape[1] <= LANE, w.shape

    w_pack = jnp.stack([_pad2(w, LANE, LANE) for w in ws], axis=0)     # [4,128,128]
    b_pack = jnp.concatenate([_pad2(b, 1, LANE) for b in bs], axis=0)  # [4,128]
    out_dim = p["w4"].shape[1]
    return w_pack, b_pack, out_dim


@functools.partial(jax.jit, static_argnames=("out_dim",))
def neural_network_forward(x, w_pack, b_pack, out_dim):
    n, d = x.shape
    assert d <= LANE, d

    # Only align to the 8-row/8-lane sublane granule (tiny, often a no-op);
    # no 128-lane input padding and no 128-lane output padding.
    n8 = max(8, _round_up(n, 8))
    d8 = _round_up(d, 8)
    if (n8, d8) != (n, d):
        x = jnp.pad(x, ((0, n8 - n), (0, d8 - d)))

    # Batch tile: large (amortize ~0.35us/step overhead) but keep >= 2 grid
    # steps when there is enough work so the "parallel" axis can shard across
    # both TensorCores on v7x.
    tm = min(TM_MAX, max(8, _round_up(-(-n8 // 2), 8)))
    grid = pl.cdiv(n8, tm)

    cost = pl.CostEstimate(
        flops=2 * n8 * LANE * (d8 + 3 * LANE),
        transcendentals=n8 * (2 * LANE + out_dim),
        bytes_accessed=4 * (n8 * d8 + 4 * LANE * LANE + 4 * LANE + n8 * out_dim),
    )

    out = pl.pallas_call(
        functools.partial(_mlp_kernel, d=d8, out_dim=out_dim),
        out_shape=jax.ShapeDtypeStruct((n8, out_dim), jnp.float32),
        grid=(grid,),
        in_specs=[
            pl.BlockSpec((tm, d8), lambda i: (i, 0)),            # x: tiled over batch, narrow lanes
            pl.BlockSpec((4, LANE, LANE), lambda i: (0, 0, 0)),  # weights: VMEM-resident
            pl.BlockSpec((4, LANE), lambda i: (0, 0)),           # biases: VMEM-resident
        ],
        out_specs=pl.BlockSpec((tm, out_dim), lambda i: (i, 0)),
        compiler_params=pltpu.CompilerParams(
            dimension_semantics=("parallel",),
        ),
        cost_estimate=cost,
    )(x, w_pack, b_pack)

    return out[:n] if n8 != n else out


def init_params(key, input_dim, hidden_1, hidden_2, hidden_3, output_dim=1):
    """Deterministic init mirroring torch.nn.Linear defaults (uniform ±1/sqrt(fan_in)).
    Weights stored as [in, out]. BatchNorm params get non-trivial deterministic
    values so the normalize/affine path is exercised."""
    def linear(key, fan_in, fan_out):
        kw, kb = jax.random.split(key)
        bound = 1.0 / jnp.sqrt(fan_in)
        w = jax.random.uniform(kw, (fan_in, fan_out), jnp.float32, -bound, bound)
        b = jax.random.uniform(kb, (1, fan_out), jnp.float32, -bound, bound)
        return w, b

    k1, k2, k3, k4, kbn = jax.random.split(key, 5)
    w1, b1 = linear(k1, input_dim, hidden_1)
    w2, b2 = linear(k2, hidden_1, hidden_2)
    w3, b3 = linear(k3, hidden_2, hidden_3)
    w4, b4 = linear(k4, hidden_3, output_dim)

    kg2, kbe2, km2, kv2, kg3, kbe3, km3, kv3 = jax.random.split(kbn, 8)
    return dict(
        w1=w1, b1=b1, w2=w2, b2=b2, w3=w3, b3=b3, w4=w4, b4=b4,
        g2=jax.random.uniform(kg2, (1, hidden_2), jnp.float32, 0.5, 1.5),
        be2=jax.random.uniform(kbe2, (1, hidden_2), jnp.float32, -0.1, 0.1),
        m2=jax.random.uniform(km2, (1, hidden_2), jnp.float32, -0.2, 0.2),
        v2=jax.random.uniform(kv2, (1, hidden_2), jnp.float32, 0.5, 1.5),
        g3=jax.random.uniform(kg3, (1, hidden_3), jnp.float32, 0.5, 1.5),
        be3=jax.random.uniform(kbe3, (1, hidden_3), jnp.float32, -0.1, 0.1),
        m3=jax.random.uniform(km3, (1, hidden_3), jnp.float32, -0.2, 0.2),
        v3=jax.random.uniform(kv3, (1, hidden_3), jnp.float32, 0.5, 1.5),
    )


def reference_forward(x, p):
    """Pure-JAX reference (eval-mode semantics, un-folded BN) for correctness."""
    h = jnp.maximum(x @ p["w1"] + p["b1"], 0.0)
    h = jnp.tanh(h @ p["w2"] + p["b2"])
    h = (h - p["m2"]) / jnp.sqrt(p["v2"] + BN_EPS) * p["g2"] + p["be2"]
    h = jnp.tanh(h @ p["w3"] + p["b3"])
    h = (h - p["m3"]) / jnp.sqrt(p["v3"] + BN_EPS) * p["g3"] + p["be3"]
    return jax.nn.sigmoid(h @ p["w4"] + p["b4"])


if __name__ == "__main__":
    # Small shapes consistent with the module: batch=8, input_dim=16,
    # hidden_1=hidden_2=hidden_3=32, output_dim=1.
    batch, input_dim = 8, 16
    hidden_1, hidden_2, hidden_3, output_dim = 32, 32, 32, 1

    key = jax.random.PRNGKey(0)
    kx, kp = jax.random.split(key)
    x = jax.random.normal(kx, (batch, input_dim), jnp.float32)
    params = init_params(kp, input_dim, hidden_1, hidden_2, hidden_3, output_dim)

    w_pack, b_pack, out_dim = fold_and_pack_params(params)
    out = neural_network_forward(x, w_pack, b_pack, out_dim=out_dim)
    out = jax.block_until_ready(out)

    ref = reference_forward(x, params)
    assert out.shape == (batch, output_dim), out.shape
    max_err = jnp.max(jnp.abs(out - ref))
    assert jnp.allclose(out, ref, atol=1e-5, rtol=1e-4), f"max abs err {max_err}"
    print("KERNEL_OK")
</pallas_src>

<mosaic_0001>
module attributes {stable_mosaic.version = 11 : i64} {
  func.func @_mlp_kernel(%arg0: i32, %arg1: memref<8x16xf32, #tpu.memory_space<vmem>>, %arg2: memref<4x128x128xf32, #tpu.memory_space<vmem>>, %arg3: memref<4x128xf32, #tpu.memory_space<vmem>>, %arg4: memref<8x1xf32, #tpu.memory_space<vmem>>) attributes {dimension_semantics = [#tpu.dimension_semantics<parallel>], iteration_bounds = array<i64: 1>, scalar_prefetch = 0 : i64, scratch_operands = 0 : i64, tpu.core_type = #tpu.core_type<tc>, window_params = [{transform_indices = @transform_0, window_bounds = array<i64: 8, 16>}, {pipeline_mode = #tpu.pipeline_mode<synchronous>, transform_indices = @transform_1, window_bounds = array<i64: 4, 128, 128>}, {pipeline_mode = #tpu.pipeline_mode<synchronous>, transform_indices = @transform_2, window_bounds = array<i64: 4, 128>}, {transform_indices = @transform_3, window_bounds = array<i64: 8, 1>}]} {
    %c0 = arith.constant 0 : index
    %c0_0 = arith.constant 0 : index
    %0 = vector.load %arg1[%c0, %c0_0] : memref<8x16xf32, #tpu.memory_space<vmem>>, vector<8x16xf32>
    %c0_1 = arith.constant 0 : index
    %c0_2 = arith.constant 0 : index
    %c0_3 = arith.constant 0 : index
    %1 = vector.load %arg2[%c0_1, %c0_2, %c0_3] : memref<4x128x128xf32, #tpu.memory_space<vmem>>, vector<1x128x128xf32>
    %2 = vector.shape_cast %1 : vector<1x128x128xf32> to vector<128x128xf32>
    %3 = vector.extract_strided_slice %2 {offsets = [0, 0], sizes = [16, 128], strides = [1, 1]} : vector<128x128xf32> to vector<16x128xf32>
    %cst = arith.constant dense<0.000000e+00> : vector<8x128xf32>
    %4 = tpu.matmul %0, %3, %cst {dimension_numbers = #tpu.dot_dimension_numbers<[1], [0], [0], [1], [0, 0, 1, 1], [], []>} : vector<8x16xf32>, vector<16x128xf32>, vector<8x128xf32> -> vector<8x128xf32>
    %c0_4 = arith.constant 0 : index
    %c0_5 = arith.constant 0 : index
    %5 = vector.load %arg3[%c0_4, %c0_5] : memref<4x128xf32, #tpu.memory_space<vmem>>, vector<1x128xf32>
    %6 = vector.broadcast %5 : vector<1x128xf32> to vector<8x128xf32>
    %7 = arith.addf %4, %6 : vector<8x128xf32>
    %cst_6 = arith.constant 0.000000e+00 : f32
    %8 = vector.broadcast %cst_6 : f32 to vector<8x128xf32>
    %9 = arith.maximumf %7, %8 : vector<8x128xf32>
    %c1 = arith.constant 1 : index
    %c0_7 = arith.constant 0 : index
    %c0_8 = arith.constant 0 : index
    %10 = vector.load %arg2[%c1, %c0_7, %c0_8] : memref<4x128x128xf32, #tpu.memory_space<vmem>>, vector<1x128x128xf32>
    %11 = vector.shape_cast %10 : vector<1x128x128xf32> to vector<128x128xf32>
    %cst_9 = arith.constant dense<0.000000e+00> : vector<8x128xf32>
    %12 = tpu.matmul %9, %11, %cst_9 {dimension_numbers = #tpu.dot_dimension_numbers<[1], [0], [0], [1], [0, 0, 1, 1], [], []>} : vector<8x128xf32>, vector<128x128xf32>, vector<8x128xf32> -> vector<8x128xf32>
    %c1_10 = arith.constant 1 : index
    %c0_11 = arith.constant 0 : index
    %13 = vector.load %arg3[%c1_10, %c0_11] : memref<4x128xf32, #tpu.memory_space<vmem>>, vector<1x128xf32>
    %14 = vector.broadcast %13 : vector<1x128xf32> to vector<8x128xf32>
    %15 = arith.addf %12, %14 : vector<8x128xf32>
    %16 = math.tanh %15 : vector<8x128xf32>
    %c2 = arith.constant 2 : index
    %c0_12 = arith.constant 0 : index
    %c0_13 = arith.constant 0 : index
    %17 = vector.load %arg2[%c2, %c0_12, %c0_13] : memref<4x128x128xf32, #tpu.memory_space<vmem>>, vector<1x128x128xf32>
    %18 = vector.shape_cast %17 : vector<1x128x128xf32> to vector<128x128xf32>
    %cst_14 = arith.constant dense<0.000000e+00> : vector<8x128xf32>
    %19 = tpu.matmul %16, %18, %cst_14 {dimension_numbers = #tpu.dot_dimension_numbers<[1], [0], [0], [1], [0, 0, 1, 1], [], []>} : vector<8x128xf32>, vector<128x128xf32>, vector<8x128xf32> -> vector<8x128xf32>
    %c2_15 = arith.constant 2 : index
    %c0_16 = arith.constant 0 : index
    %20 = vector.load %arg3[%c2_15, %c0_16] : memref<4x128xf32, #tpu.memory_space<vmem>>, vector<1x128xf32>
    %21 = vector.broadcast %20 : vector<1x128xf32> to vector<8x128xf32>
    %22 = arith.addf %19, %21 : vector<8x128xf32>
    %23 = math.tanh %22 : vector<8x128xf32>
    %c3 = arith.constant 3 : index
    %c0_17 = arith.constant 0 : index
    %c0_18 = arith.constant 0 : index
    %24 = vector.load %arg2[%c3, %c0_17, %c0_18] : memref<4x128x128xf32, #tpu.memory_space<vmem>>, vector<1x128x128xf32>
    %25 = vector.shape_cast %24 : vector<1x128x128xf32> to vector<128x128xf32>
    %cst_19 = arith.constant dense<0.000000e+00> : vector<8x128xf32>
    %26 = tpu.matmul %23, %25, %cst_19 {dimension_numbers = #tpu.dot_dimension_numbers<[1], [0], [0], [1], [0, 0, 1, 1], [], []>} : vector<8x128xf32>, vector<128x128xf32>, vector<8x128xf32> -> vector<8x128xf32>
    %c3_20 = arith.constant 3 : index
    %c0_21 = arith.constant 0 : index
    %27 = vector.load %arg3[%c3_20, %c0_21] : memref<4x128xf32, #tpu.memory_space<vmem>>, vector<1x128xf32>
    %28 = vector.broadcast %27 : vector<1x128xf32> to vector<8x128xf32>
    %29 = arith.addf %26, %28 : vector<8x128xf32>
    %30 = vector.extract_strided_slice %29 {offsets = [0, 0], sizes = [8, 1], strides = [1, 1]} : vector<8x128xf32> to vector<8x1xf32>
    %31 = arith.negf %30 : vector<8x1xf32>
    %32 = math.exp %31 : vector<8x1xf32>
    %cst_22 = arith.constant 1.000000e+00 : f32
    %33 = vector.broadcast %cst_22 : f32 to vector<8x1xf32>
    %34 = arith.addf %33, %32 : vector<8x1xf32>
    %35 = arith.divf %33, %34 : vector<8x1xf32>
    %c0_23 = arith.constant 0 : index
    %c0_24 = arith.constant 0 : index
    %36 = vector.load %arg4[%c0_23, %c0_24] : memref<8x1xf32, #tpu.memory_space<vmem>>, vector<8x1xf32>
    tpu.vector_store %arg4[%c0_23, %c0_24], %35 {strides = array<i32>} : memref<8x1xf32, #tpu.memory_space<vmem>>, vector<8x1xf32>,
    return
  }
  func.func @transform_0(%arg0: i32) -> (i32, i32) {
    %c0_i32 = arith.constant 0 : i32
    %c0_i32_0 = arith.constant 0 : i32
    return %arg0, %c0_i32 : i32, i32
  }
  func.func @transform_1(%arg0: i32) -> (i32, i32, i32) {
    %c0_i32 = arith.constant 0 : i32
    %c0_i32_0 = arith.constant 0 : i32
    %c0_i32_1 = arith.constant 0 : i32
    %c0_i32_2 = arith.constant 0 : i32
    return %c0_i32, %c0_i32_0, %c0_i32_1 : i32, i32, i32
  }
  func.func @transform_2(%arg0: i32) -> (i32, i32) {
    %c0_i32 = arith.constant 0 : i32
    %c0_i32_0 = arith.constant 0 : i32
    %c0_i32_1 = arith.constant 0 : i32
    return %c0_i32, %c0_i32_0 : i32, i32
  }
  func.func @transform_3(%arg0: i32) -> (i32, i32) {
    %c0_i32 = arith.constant 0 : i32
    %c0_i32_0 = arith.constant 0 : i32
    return %arg0, %c0_i32 : i32, i32
  }
}

</mosaic_0001>

<llo_original>
// kernel: neural_network_forward.1
$region0: #{neural_network_forward.1}
  #allocation0 [shape = 'u32[]', space=smem, size = 0x4, offset = 0x4, fixed_abs, tag = 'smem constant byte address 0x4 - core index']
  #allocation1 [shape = 'u32[144,128]{1,0:T(1,128)}', space=vmem, size = 0x12000, scoped, tag = 'internal scratch']
  %s0 = inlined_call_operand.hbm [shape: f32[8,16], index: 0, kind: input, shape index: {}]
  %s1 = inlined_call_operand.hbm [shape: f32[4,128,128], index: 1, kind: input, shape index: {}]
  %s2 = inlined_call_operand.vmem [shape: f32[4,128], index: 2, kind: input, shape index: {}]
  %s3 = inlined_call_operand.vmem [shape: f32[8,1], index: 3, kind: output, shape index: {}]
  %s4 = sld [smem:[#allocation0]]
  $region30: #{neural_network_forward.1} parent=0
    _
  %s6 = ssub.s32 1, %s4
  %s7 = scalar_select 0, %s6, %s4
  $region1: #{neural_network_forward.1} parent=0
    #allocation2 [shape = 'u8[4096]{0}', space=vmem, size = 0x1000, scoped, tag = 'input window, operand 0, single buffered']
    #allocation3 [shape = 's32[1]{0}', space=sflag, size = 0x4, scoped, tag = 'scoped memory for neural_network_forward.1']
    #allocation4 [shape = 'u8[262144]{0}', space=vmem, size = 0x40000, scoped, tag = 'input window, operand 1, single buffered']
    #allocation5 [shape = 's32[1]{0}', space=sflag, size = 0x4, scoped, tag = 'scoped memory for neural_network_forward.1']
    %8 = vsyncpa [#allocation3], 0
    %9 = vsyncpa [#allocation5], 0
    // Predicated region
    $region2: #{neural_network_forward.1} parent=1 // pred_check
      _
    $region3: #{neural_network_forward.1} parent=1 // pred_check_branch
      %11 = sbr.rel (0) target = $region5
    $region4: #{neural_network_forward.1} parent=1 // pred_region
      %s13 = ssub.s32 128, 128
      %14 = vsyncadd [#allocation3], %s13
      %s16 = sshll.u32 [#allocation2], 4
      %s17 = int_to_ptr.vmem [resolvable:$true] %s16
      %19 = dma.hbm_to_vmem [thread:$0]  %s0, 128, %s17, [#allocation3]
    $region5: #{neural_network_forward.1} parent=1 // pred_fallthru
      _
    // Predicated region
    $region6: #{neural_network_forward.1} parent=1 // pred_check
      _
    $region7: #{neural_network_forward.1} parent=1 // pred_check_branch
      %21 = sbr.rel (0) target = $region9
    $region8: #{neural_network_forward.1} parent=1 // pred_region
      %s23 = ssub.s32 8192, 8192
      %24 = vsyncadd [#allocation5], %s23
      %s25 = sshll.u32 [#allocation4], 4
      %s26 = int_to_ptr.vmem [resolvable:$true] %s25
      %31 = dma.hbm_to_vmem [thread:$0]  %s1, 8192, %s26, [#allocation5], 128, 128, 8
    $region9: #{neural_network_forward.1} parent=1 // pred_fallthru
      _
    // Predicated region
    $region10: #{neural_network_forward.1} parent=1 // pred_check
      _
    $region11: #{neural_network_forward.1} parent=1 // pred_check_branch
      %33 = sbr.rel (0) target = $region13
    $region12: #{neural_network_forward.1} parent=1 // pred_region
      _
    $region13: #{neural_network_forward.1} parent=1 // pred_fallthru
      _
    // Predicated region
    $region14: #{neural_network_forward.1} parent=1 // pred_check
      _
    $region15: #{neural_network_forward.1} parent=1 // pred_check_branch
      %35 = sbr.rel (0) target = $region17
    $region16: #{neural_network_forward.1} parent=1 // pred_region
      %36 = dma.done [#allocation3], 128
    $region17: #{neural_network_forward.1} parent=1 // pred_fallthru
      _
    // Predicated region
    $region18: #{neural_network_forward.1} parent=1 // pred_check
      _
    $region19: #{neural_network_forward.1} parent=1 // pred_check_branch
      %38 = sbr.rel (0) target = $region21
    $region20: #{neural_network_forward.1} parent=1 // pred_region
      %39 = dma.done [#allocation5], 8192
    $region21: #{neural_network_forward.1} parent=1 // pred_fallthru
      _
    %v40 = vld [vmem:[#allocation2] sm:$0xff]
    %v41 = vld [vmem:[#allocation4] sm:$0xff]
    %v42 = vld [vmem:[#allocation4 + $0x8] sm:$0xff]
    %v43 = vld [vmem:[%s2] sm:$0x1]
    %v44 = vlaneseq
    %v45 = vshrl.u32 %v44, 7
    %v46 = vsub.s32 0, %v45
    %v47 = vrot.slane %v43, %v46
    %vm48 = vcmask 130048
    %v50 = vsel %vm48, %v40, 0
    %52 = vmatprep.subr.mxu0 0.0
    %53 = vmatpush1.msra.mxu0 %v41
    %54 = vmatprep.subr.mxu0 0.0
    %55 = vmatpush1.msra.mxu0 %v42
    %56 = vmatprep.subr.mxu0 0.0
    %57 = vmatpush1.msra.mxu0 0.0
    %58 = vmatprep.subr.mxu0 0.0
    %59 = vmatpush1.msra.mxu0 0.0
    %60 = vmatprep.subr.mxu0 0.0
    %61 = vmatpush1.msra.mxu0 0.0
    %62 = vmatprep.subr.mxu0 0.0
    %63 = vmatpush1.msra.mxu0 0.0
    %64 = vmatprep.subr.mxu0 0.0
    %65 = vmatpush1.msra.mxu0 0.0
    %66 = vmatprep.subr.mxu0 0.0
    %67 = vmatpush1.msra.mxu0 0.0
    %68 = vmatprep.subr.mxu0 0.0
    %69 = vmatpush1.msra.mxu0 0.0
    %70 = vmatprep.subr.mxu0 0.0
    %71 = vmatpush1.msra.mxu0 0.0
    %72 = vmatprep.subr.mxu0 0.0
    %73 = vmatpush1.msra.mxu0 0.0
    %74 = vmatprep.subr.mxu0 0.0
    %75 = vmatpush1.msra.mxu0 0.0
    %76 = vmatprep.subr.mxu0 0.0
    %77 = vmatpush1.msra.mxu0 0.0
    %78 = vmatprep.subr.mxu0 0.0
    %79 = vmatpush1.msra.mxu0 0.0
    %80 = vmatprep.subr.mxu0 0.0
    %81 = vmatpush1.msra.mxu0 0.0
    %82 = vmatprep.subr.mxu0 0.0
    %83 = vmatpush1.msra.mxu0 0.0
    %84 = vmatprep.subr.mxu0 0.0
    %85 = vmatpush1.msra.mxu0 0.0
    %86 = vmatprep.subr.mxu0 0.0
    %87 = vmatpush1.msra.mxu0 0.0
    %88 = vmatprep.subr.mxu0 0.0
    %89 = vmatpush1.msra.mxu0 0.0
    %90 = vmatprep.subr.mxu0 0.0
    %91 = vmatpush1.msra.mxu0 0.0
    %92 = vmatprep.subr.mxu0 0.0
    %93 = vmatpush1.msra.mxu0 0.0
    %94 = vmatprep.subr.mxu0 0.0
    %95 = vmatpush1.msra.mxu0 0.0
    %96 = vmatprep.subr.mxu0 0.0
    %97 = vmatpush1.msra.mxu0 0.0
    %98 = vmatprep.subr.mxu0 0.0
    %99 = vmatpush1.msra.mxu0 0.0
    %100 = vmatprep.subr.mxu0 0.0
    %101 = vmatpush1.msra.mxu0 0.0
    %102 = vmatprep.subr.mxu0 0.0
    %103 = vmatpush1.msra.mxu0 0.0
    %104 = vmatprep.subr.mxu0 0.0
    %105 = vmatpush1.msra.mxu0 0.0
    %106 = vmatprep.subr.mxu0 0.0
    %107 = vmatpush1.msra.mxu0 0.0
    %108 = vmatprep.subr.mxu0 0.0
    %109 = vmatpush1.msra.mxu0 0.0
    %110 = vmatprep.subr.mxu0 0.0
    %111 = vmatpush1.msra.mxu0 0.0
    %112 = vmatprep.subr.mxu0 0.0
    %113 = vmatpush1.msra.mxu0 0.0
    %114 = vmatprep.subr.mxu0 0.0
    %115 = vmatpush1.msra.mxu0 0.0
    %116 = vmatprep.mubr.f32.mxu0 0.0
    %117 = vmatmul.mubr.f32.gmra.mrb[0].mxu0 %v50
    %v118 = vpop.f32.mrb[0].mxu0
    %v119 = vadd.f32 %v47, %v118
    %v120 = vpop.f32.mrb[0].mxu0
    %121 = vdwg.mxu0
    %v122 = vmax.f32 %v119, 0.0
    %s123 = scalar_lea.vmem [#allocation4], 128
    %v124 = vld [vmem:[%s123] sm:$0xff]
    %v125 = vld [vmem:[%s123 + $0x8] sm:$0xff]
    %v126 = vld [vmem:[%s123 + $0x10] sm:$0xff]
    %v127 = vld [vmem:[%s123 + $0x18] sm:$0xff]
    %v128 = vld [vmem:[%s123 + $0x20] sm:$0xff]
    %v129 = vld [vmem:[%s123 + $0x28] sm:$0xff]
    %v130 = vld [vmem:[%s123 + $0x30] sm:$0xff]
    %v131 = vld [vmem:[%s123 + $0x38] sm:$0xff]
    %v132 = vld [vmem:[%s123 + $0x40] sm:$0xff]
    %v133 = vld [vmem:[%s123 + $0x48] sm:$0xff]
    %v134 = vld [vmem:[%s123 + $0x50] sm:$0xff]
    %v135 = vld [vmem:[%s123 + $0x58] sm:$0xff]
    %v136 = vld [vmem:[%s123 + $0x60] sm:$0xff]
    %v137 = vld [vmem:[%s123 + $0x68] sm:$0xff]
    %v138 = vld [vmem:[%s123 + $0x70] sm:$0xff]
    %v139 = vld [vmem:[%s123 + $0x78] sm:$0xff]
    %v140 = vld [vmem:[%s2 + $0x1] sm:$0x1]
    %v141 = vlaneseq
    %v142 = vshrl.u32 %v141, 7
    %v143 = vsub.s32 0, %v142
    %v144 = vrot.slane %v140, %v143
    %145 = vmatprep.subr.mxu0 0.0
    %146 = vmatpush1.msra.mxu0 %v124
    %147 = vmatprep.subr.mxu0 0.0
    %148 = vmatpush1.msra.mxu0 %v125
    %149 = vmatprep.subr.mxu0 0.0
    %150 = vmatpush1.msra.mxu0 %v126
    %151 = vmatprep.subr.mxu0 0.0
    %152 = vmatpush1.msra.mxu0 %v127
    %153 = vmatprep.subr.mxu0 0.0
    %154 = vmatpush1.msra.mxu0 %v128
    %155 = vmatprep.subr.mxu0 0.0
    %156 = vmatpush1.msra.mxu0 %v129
    %157 = vmatprep.subr.mxu0 0.0
    %158 = vmatpush1.msra.mxu0 %v130
    %159 = vmatprep.subr.mxu0 0.0
    %160 = vmatpush1.msra.mxu0 %v131
    %161 = vmatprep.subr.mxu0 0.0
    %162 = vmatpush1.msra.mxu0 %v132
    %163 = vmatprep.subr.mxu0 0.0
    %164 = vmatpush1.msra.mxu0 %v133
    %165 = vmatprep.subr.mxu0 0.0
    %166 = vmatpush1.msra.mxu0 %v134
    %167 = vmatprep.subr.mxu0 0.0
    %168 = vmatpush1.msra.mxu0 %v135
    %169 = vmatprep.subr.mxu0 0.0
    %170 = vmatpush1.msra.mxu0 %v136
    %171 = vmatprep.subr.mxu0 0.0
    %172 = vmatpush1.msra.mxu0 %v137
    %173 = vmatprep.subr.mxu0 0.0
    %174 = vmatpush1.msra.mxu0 %v138
    %175 = vmatprep.subr.mxu0 0.0
    %176 = vmatpush1.msra.mxu0 %v139
    %177 = vmatprep.subr.mxu0 0.0
    %178 = vmatpush1.msra.mxu0 0.0
    %179 = vmatprep.subr.mxu0 0.0
    %180 = vmatpush1.msra.mxu0 0.0
    %181 = vmatprep.subr.mxu0 0.0
    %182 = vmatpush1.msra.mxu0 0.0
    %183 = vmatprep.subr.mxu0 0.0
    %184 = vmatpush1.msra.mxu0 0.0
    %185 = vmatprep.subr.mxu0 0.0
    %186 = vmatpush1.msra.mxu0 0.0
    %187 = vmatprep.subr.mxu0 0.0
    %188 = vmatpush1.msra.mxu0 0.0
    %189 = vmatprep.subr.mxu0 0.0
    %190 = vmatpush1.msra.mxu0 0.0
    %191 = vmatprep.subr.mxu0 0.0
    %192 = vmatpush1.msra.mxu0 0.0
    %193 = vmatprep.subr.mxu0 0.0
    %194 = vmatpush1.msra.mxu0 0.0
    %195 = vmatprep.subr.mxu0 0.0
    %196 = vmatpush1.msra.mxu0 0.0
    %197 = vmatprep.subr.mxu0 0.0
    %198 = vmatpush1.msra.mxu0 0.0
    %199 = vmatprep.subr.mxu0 0.0
    %200 = vmatpush1.msra.mxu0 0.0
    %201 = vmatprep.subr.mxu0 0.0
    %202 = vmatpush1.msra.mxu0 0.0
    %203 = vmatprep.subr.mxu0 0.0
    %204 = vmatpush1.msra.mxu0 0.0
    %205 = vmatprep.subr.mxu0 0.0
    %206 = vmatpush1.msra.mxu0 0.0
    %207 = vmatprep.subr.mxu0 0.0
    %208 = vmatpush1.msra.mxu0 0.0
    %209 = vmatprep.mubr.f32.mxu0 0.0
    %210 = vmatmul.mubr.f32.gmra.mrb[0].mxu0 %v122
    %v211 = vpop.f32.mrb[0].mxu0
    %v212 = vadd.f32 %v144, %v211
    %v213 = vpop.f32.mrb[0].mxu0
    %214 = vdwg.mxu0
    %v215 = vtanh.pop %v212
    %s216 = scalar_lea.vmem [#allocation4], 256
    %v217 = vld [vmem:[%s216] sm:$0xff]
    %v218 = vld [vmem:[%s216 + $0x8] sm:$0xff]
    %v219 = vld [vmem:[%s216 + $0x10] sm:$0xff]
    %v220 = vld [vmem:[%s216 + $0x18] sm:$0xff]
    %v221 = vld [vmem:[%s216 + $0x20] sm:$0xff]
    %v222 = vld [vmem:[%s216 + $0x28] sm:$0xff]
    %v223 = vld [vmem:[%s216 + $0x30] sm:$0xff]
    %v224 = vld [vmem:[%s216 + $0x38] sm:$0xff]
    %v225 = vld [vmem:[%s216 + $0x40] sm:$0xff]
    %v226 = vld [vmem:[%s216 + $0x48] sm:$0xff]
    %v227 = vld [vmem:[%s216 + $0x50] sm:$0xff]
    %v228 = vld [vmem:[%s216 + $0x58] sm:$0xff]
    %v229 = vld [vmem:[%s216 + $0x60] sm:$0xff]
    %v230 = vld [vmem:[%s216 + $0x68] sm:$0xff]
    %v231 = vld [vmem:[%s216 + $0x70] sm:$0xff]
    %v232 = vld [vmem:[%s216 + $0x78] sm:$0xff]
    %v233 = vld [vmem:[%s2 + $0x2] sm:$0x1]
    %v234 = vlaneseq
    %v235 = vshrl.u32 %v234, 7
    %v236 = vsub.s32 0, %v235
    %v237 = vrot.slane %v233, %v236
    %238 = vmatprep.subr.mxu0 0.0
    %239 = vmatpush1.msra.mxu0 %v217
    %240 = vmatprep.subr.mxu0 0.0
    %241 = vmatpush1.msra.mxu0 %v218
    %242 = vmatprep.subr.mxu0 0.0
    %243 = vmatpush1.msra.mxu0 %v219
    %244 = vmatprep.subr.mxu0 0.0
    %245 = vmatpush1.msra.mxu0 %v220
    %246 = vmatprep.subr.mxu0 0.0
    %247 = vmatpush1.msra.mxu0 %v221
    %248 = vmatprep.subr.mxu0 0.0
    %249 = vmatpush1.msra.mxu0 %v222
    %250 = vmatprep.subr.mxu0 0.0
    %251 = vmatpush1.msra.mxu0 %v223
    %252 = vmatprep.subr.mxu0 0.0
    %253 = vmatpush1.msra.mxu0 %v224
    %254 = vmatprep.subr.mxu0 0.0
    %255 = vmatpush1.msra.mxu0 %v225
    %256 = vmatprep.subr.mxu0 0.0
    %257 = vmatpush1.msra.mxu0 %v226
    %258 = vmatprep.subr.mxu0 0.0
    %259 = vmatpush1.msra.mxu0 %v227
    %260 = vmatprep.subr.mxu0 0.0
    %261 = vmatpush1.msra.mxu0 %v228
    %262 = vmatprep.subr.mxu0 0.0
    %263 = vmatpush1.msra.mxu0 %v229
    %264 = vmatprep.subr.mxu0 0.0
    %265 = vmatpush1.msra.mxu0 %v230
    %266 = vmatprep.subr.mxu0 0.0
    %267 = vmatpush1.msra.mxu0 %v231
    %268 = vmatprep.subr.mxu0 0.0
    %269 = vmatpush1.msra.mxu0 %v232
    %270 = vmatprep.subr.mxu0 0.0
    %271 = vmatpush1.msra.mxu0 0.0
    %272 = vmatprep.subr.mxu0 0.0
    %273 = vmatpush1.msra.mxu0 0.0
    %274 = vmatprep.subr.mxu0 0.0
    %275 = vmatpush1.msra.mxu0 0.0
    %276 = vmatprep.subr.mxu0 0.0
    %277 = vmatpush1.msra.mxu0 0.0
    %278 = vmatprep.subr.mxu0 0.0
    %279 = vmatpush1.msra.mxu0 0.0
    %280 = vmatprep.subr.mxu0 0.0
    %281 = vmatpush1.msra.mxu0 0.0
    %282 = vmatprep.subr.mxu0 0.0
    %283 = vmatpush1.msra.mxu0 0.0
    %284 = vmatprep.subr.mxu0 0.0
    %285 = vmatpush1.msra.mxu0 0.0
    %286 = vmatprep.subr.mxu0 0.0
    %287 = vmatpush1.msra.mxu0 0.0
    %288 = vmatprep.subr.mxu0 0.0
    %289 = vmatpush1.msra.mxu0 0.0
    %290 = vmatprep.subr.mxu0 0.0
    %291 = vmatpush1.msra.mxu0 0.0
    %292 = vmatprep.subr.mxu0 0.0
    %293 = vmatpush1.msra.mxu0 0.0
    %294 = vmatprep.subr.mxu0 0.0
    %295 = vmatpush1.msra.mxu0 0.0
    %296 = vmatprep.subr.mxu0 0.0
    %297 = vmatpush1.msra.mxu0 0.0
    %298 = vmatprep.subr.mxu0 0.0
    %299 = vmatpush1.msra.mxu0 0.0
    %300 = vmatprep.subr.mxu0 0.0
    %301 = vmatpush1.msra.mxu0 0.0
    %302 = vmatprep.mubr.f32.mxu0 0.0
    %303 = vmatmul.mubr.f32.gmra.mrb[0].mxu0 %v215
    %v304 = vpop.f32.mrb[0].mxu0
    %v305 = vadd.f32 %v237, %v304
    %v306 = vpop.f32.mrb[0].mxu0
    %307 = vdwg.mxu0
    %v308 = vtanh.pop %v305
    %s309 = scalar_lea.vmem [#allocation4], 384
    %v310 = vld [vmem:[%s309] sm:$0xff]
    %v311 = vld [vmem:[%s309 + $0x8] sm:$0xff]
    %v312 = vld [vmem:[%s309 + $0x10] sm:$0xff]
    %v313 = vld [vmem:[%s309 + $0x18] sm:$0xff]
    %v314 = vld [vmem:[%s309 + $0x20] sm:$0xff]
    %v315 = vld [vmem:[%s309 + $0x28] sm:$0xff]
    %v316 = vld [vmem:[%s309 + $0x30] sm:$0xff]
    %v317 = vld [vmem:[%s309 + $0x38] sm:$0xff]
    %v318 = vld [vmem:[%s309 + $0x40] sm:$0xff]
    %v319 = vld [vmem:[%s309 + $0x48] sm:$0xff]
    %v320 = vld [vmem:[%s309 + $0x50] sm:$0xff]
    %v321 = vld [vmem:[%s309 + $0x58] sm:$0xff]
    %v322 = vld [vmem:[%s309 + $0x60] sm:$0xff]
    %v323 = vld [vmem:[%s309 + $0x68] sm:$0xff]
    %v324 = vld [vmem:[%s309 + $0x70] sm:$0xff]
    %v325 = vld [vmem:[%s309 + $0x78] sm:$0xff]
    %v326 = vld [vmem:[%s2 + $0x3] sm:$0x1]
    %v327 = vlaneseq
    %v328 = vshrl.u32 %v327, 7
    %v329 = vsub.s32 0, %v328
    %v330 = vrot.slane %v326, %v329
    %331 = vmatprep.subr.mxu0 0.0
    %332 = vmatpush1.msra.mxu0 %v310
    %333 = vmatprep.subr.mxu0 0.0
    %334 = vmatpush1.msra.mxu0 %v311
    %335 = vmatprep.subr.mxu0 0.0
    %336 = vmatpush1.msra.mxu0 %v312
    %337 = vmatprep.subr.mxu0 0.0
    %338 = vmatpush1.msra.mxu0 %v313
    %339 = vmatprep.subr.mxu0 0.0
    %340 = vmatpush1.msra.mxu0 %v314
    %341 = vmatprep.subr.mxu0 0.0
    %342 = vmatpush1.msra.mxu0 %v315
    %343 = vmatprep.subr.mxu0 0.0
    %344 = vmatpush1.msra.mxu0 %v316
    %345 = vmatprep.subr.mxu0 0.0
    %346 = vmatpush1.msra.mxu0 %v317
    %347 = vmatprep.subr.mxu0 0.0
    %348 = vmatpush1.msra.mxu0 %v318
    %349 = vmatprep.subr.mxu0 0.0
    %350 = vmatpush1.msra.mxu0 %v319
    %351 = vmatprep.subr.mxu0 0.0
    %352 = vmatpush1.msra.mxu0 %v320
    %353 = vmatprep.subr.mxu0 0.0
    %354 = vmatpush1.msra.mxu0 %v321
    %355 = vmatprep.subr.mxu0 0.0
    %356 = vmatpush1.msra.mxu0 %v322
    %357 = vmatprep.subr.mxu0 0.0
    %358 = vmatpush1.msra.mxu0 %v323
    %359 = vmatprep.subr.mxu0 0.0
    %360 = vmatpush1.msra.mxu0 %v324
    %361 = vmatprep.subr.mxu0 0.0
    %362 = vmatpush1.msra.mxu0 %v325
    %363 = vmatprep.subr.mxu0 0.0
    %364 = vmatpush1.msra.mxu0 0.0
    %365 = vmatprep.subr.mxu0 0.0
    %366 = vmatpush1.msra.mxu0 0.0
    %367 = vmatprep.subr.mxu0 0.0
    %368 = vmatpush1.msra.mxu0 0.0
    %369 = vmatprep.subr.mxu0 0.0
    %370 = vmatpush1.msra.mxu0 0.0
    %371 = vmatprep.subr.mxu0 0.0
    %372 = vmatpush1.msra.mxu0 0.0
    %373 = vmatprep.subr.mxu0 0.0
    %374 = vmatpush1.msra.mxu0 0.0
    %375 = vmatprep.subr.mxu0 0.0
    %376 = vmatpush1.msra.mxu0 0.0
    %377 = vmatprep.subr.mxu0 0.0
    %378 = vmatpush1.msra.mxu0 0.0
    %379 = vmatprep.subr.mxu0 0.0
    %380 = vmatpush1.msra.mxu0 0.0
    %381 = vmatprep.subr.mxu0 0.0
    %382 = vmatpush1.msra.mxu0 0.0
    %383 = vmatprep.subr.mxu0 0.0
    %384 = vmatpush1.msra.mxu0 0.0
    %385 = vmatprep.subr.mxu0 0.0
    %386 = vmatpush1.msra.mxu0 0.0
    %387 = vmatprep.subr.mxu0 0.0
    %388 = vmatpush1.msra.mxu0 0.0
    %389 = vmatprep.subr.mxu0 0.0
    %390 = vmatpush1.msra.mxu0 0.0
    %391 = vmatprep.subr.mxu0 0.0
    %392 = vmatpush1.msra.mxu0 0.0
    %393 = vmatprep.subr.mxu0 0.0
    %394 = vmatpush1.msra.mxu0 0.0
    %395 = vmatprep.mubr.f32.mxu0 0.0
    %396 = vmatmul.mubr.f32.gmra.mrb[0].mxu0 %v308
    %v397 = vpop.f32.mrb[0].mxu0
    %v398 = vadd.f32 %v330, %v397
    %v399 = vpop.f32.mrb[0].mxu0
    %400 = vdwg.mxu0
    %v401 = vxor.u32 %v398, 2147483648
    %v402 = vmul.f32 %v401, 1.442695
    %v403 = vpow.pop %v402
    %v404 = vadd.f32 %v403, 1.0
    %v405 = vrcp.pop %v404
    %v406 = vmul.f32 1.0, %v405
    %vm407 = vcmask 7168
    %408 = vst.msk [vmem:[%s3] sm:$0xff] %vm407, %v406
    // Predicated region
    $region22: #{neural_network_forward.1} parent=1 // pred_check
      _
    $region23: #{neural_network_forward.1} parent=1 // pred_check_branch
      %410 = sbr.rel (0) target = $region25
    $region24: #{neural_network_forward.1} parent=1 // pred_region
      _
    $region25: #{neural_network_forward.1} parent=1 // pred_fallthru
      _
    // Predicated region
    $region26: #{neural_network_forward.1} parent=1 // pred_check
      _
    $region27: #{neural_network_forward.1} parent=1 // pred_check_branch
      %412 = sbr.rel (0) target = $region29
    $region28: #{neural_network_forward.1} parent=1 // pred_region
      _
    $region29: #{neural_network_forward.1} parent=1 // pred_fallthru
      _
    %413 = vsyncpa [#allocation3], 1
    %414 = vsyncpa [#allocation5], 1

</llo_original>
